<compile_context>
chip_gen: v6e
topology: v6e:2x2x1
jax: 0.10.0
libtpu: 0.0.40
codegen_flags: <defaults>
</compile_context>

<pallas_src>
import jax
import jax.numpy as jnp
from jax.experimental import pallas as pl
from jax.experimental.pallas import tpu as pltpu


def _model_kernel(params_ref, x_ref, o_ref):
    # params_ref: SMEM f32[6] = [w1_00, w1_01, b1, w2_00, w2_01, b2]
    # x_ref:      SMEM f32[4] = x1.reshape(-1) = [x[0,0,0], x[0,0,1], x[0,1,0], x[0,1,1]]
    # o_ref:      SMEM f32[1,1]
    x00 = x_ref[0]
    x01 = x_ref[1]
    x10 = x_ref[2]
    x11 = x_ref[3]

    w1_0 = params_ref[0]
    w1_1 = params_ref[1]
    b1 = params_ref[2]
    w2_0 = params_ref[3]
    w2_1 = params_ref[4]
    b2 = params_ref[5]

    # linear1 over the channel axis of x1.permute(0,2,1):
    #   v2[n] = x[0,n]*w1[0,0] + x[1,n]*w1[0,1] + b1 ,  n in {0,1}
    v2_0 = x00 * w1_0 + x10 * w1_1 + b1
    v2_1 = x01 * w1_0 + x11 * w1_1 + b1

    # relu then hardtanh; after relu the value is >= 0 so only the upper clip matters.
    x4_0 = jnp.minimum(jnp.maximum(v2_0, 0.0), 1.0)
    x4_1 = jnp.minimum(jnp.maximum(v2_1, 0.0), 1.0)

    # v1[c] = max over the last dim of x1
    v1_0 = jnp.maximum(x00, x01)
    v1_1 = jnp.maximum(x10, x11)

    v3_0 = v1_0 + x4_0
    v3_1 = v1_1 + x4_1

    # (v3 == -1).float()   (exact float equality, matching the source graph)
    m0 = jnp.where(v3_0 == -1.0, 1.0, 0.0)
    m1 = jnp.where(v3_1 == -1.0, 1.0, 0.0)

    # linear2 over the size-2 axis of the mask (after permute(0,2,1)) -> scalar
    o_ref[0, 0] = m0 * w2_0 + m1 * w2_1 + b2


def pack_params(w1, b1, w2, b2):
    # Done ONCE at model init — hoisted out of the per-call hot path.
    return jnp.concatenate(
        [w1.reshape(-1), b1.reshape(-1), w2.reshape(-1), b2.reshape(-1)]
    ).astype(jnp.float32)  # (6,)


@jax.jit
def model_forward(params_packed, x):
    B = x.shape[0]
    assert B == 1, "This kernel implements the spec shape (1, 2, 2)."
    x_flat = x.reshape(-1).astype(jnp.float32)  # (4,) contiguous flatten — no data movement
    out = pl.pallas_call(
        _model_kernel,
        out_shape=jax.ShapeDtypeStruct((1, 1), jnp.float32),
        in_specs=[
            pl.BlockSpec(memory_space=pltpu.SMEM),   # packed params (6,)
            pl.BlockSpec(memory_space=pltpu.SMEM),   # flattened x (4,)
        ],
        out_specs=pl.BlockSpec(memory_space=pltpu.SMEM),
    )(params_packed, x_flat)
    return out.reshape(B, 1, 1)


def reference_forward(x, w1, b1, w2, b2):
    # Pure-JAX reference of the same (repaired) forward.
    xp = jnp.swapaxes(x, 1, 2)                            # permute(0,2,1)
    v2 = xp @ w1.T + b1                                   # (B, 2, 1)
    x3 = jax.nn.relu(v2)
    x4 = jnp.clip(x3, -1.0, 1.0)                          # hardtanh
    v1 = jnp.max(x, axis=-1)[..., None]                   # (B, 2, 1)
    v3 = v1 + x4
    mask = (v3 == -1.0).astype(jnp.float32)
    mp = jnp.swapaxes(mask, 1, 2)                         # (B, 1, 2)
    return mp @ w2.T + b2                                 # (B, 1, 1)


if __name__ == "__main__":
    key = jax.random.PRNGKey(0)
    kx, kw1, kb1, kw2, kb2 = jax.random.split(key, 5)

    # x1 ~ torch.randn(1, 2, 2)
    x = jax.random.normal(kx, (1, 2, 2), dtype=jnp.float32)

    # PyTorch Linear-style uniform init, bound = 1/sqrt(in_features=2).
    bound = 1.0 / jnp.sqrt(2.0)
    w1 = jax.random.uniform(kw1, (1, 2), minval=-bound, maxval=bound, dtype=jnp.float32)
    b1 = jax.random.uniform(kb1, (1,), minval=-bound, maxval=bound, dtype=jnp.float32)
    w2 = jax.random.uniform(kw2, (1, 2), minval=-bound, maxval=bound, dtype=jnp.float32)
    b2 = jax.random.uniform(kb2, (1,), minval=-bound, maxval=bound, dtype=jnp.float32)

    params_packed = pack_params(w1, b1, w2, b2)           # once, outside the hot path

    out = model_forward(params_packed, x)
    out = jax.block_until_ready(out)

    ref = reference_forward(x, w1, b1, w2, b2)
    assert out.shape == (1, 1, 1)
    assert jnp.allclose(out, ref, atol=1e-5, rtol=1e-5)

    print("KERNEL_OK")
</pallas_src>

<mosaic_0001>
module attributes {stable_mosaic.version = 11 : i64} {
  func.func @_model_kernel(%arg0: memref<6xf32, #tpu.memory_space<smem>>, %arg1: memref<4xf32, #tpu.memory_space<smem>>, %arg2: memref<1x1xf32, #tpu.memory_space<smem>>) attributes {dimension_semantics = [], scalar_prefetch = 0 : i64, scratch_operands = 0 : i64, tpu.core_type = #tpu.core_type<tc>} {
    %c0 = arith.constant 0 : index
    %0 = memref.load %arg1[%c0] : memref<4xf32, #tpu.memory_space<smem>>
    %c1 = arith.constant 1 : index
    %1 = memref.load %arg1[%c1] : memref<4xf32, #tpu.memory_space<smem>>
    %c2 = arith.constant 2 : index
    %2 = memref.load %arg1[%c2] : memref<4xf32, #tpu.memory_space<smem>>
    %c3 = arith.constant 3 : index
    %3 = memref.load %arg1[%c3] : memref<4xf32, #tpu.memory_space<smem>>
    %c0_0 = arith.constant 0 : index
    %4 = memref.load %arg0[%c0_0] : memref<6xf32, #tpu.memory_space<smem>>
    %c1_1 = arith.constant 1 : index
    %5 = memref.load %arg0[%c1_1] : memref<6xf32, #tpu.memory_space<smem>>
    %c2_2 = arith.constant 2 : index
    %6 = memref.load %arg0[%c2_2] : memref<6xf32, #tpu.memory_space<smem>>
    %c3_3 = arith.constant 3 : index
    %7 = memref.load %arg0[%c3_3] : memref<6xf32, #tpu.memory_space<smem>>
    %c4 = arith.constant 4 : index
    %8 = memref.load %arg0[%c4] : memref<6xf32, #tpu.memory_space<smem>>
    %c5 = arith.constant 5 : index
    %9 = memref.load %arg0[%c5] : memref<6xf32, #tpu.memory_space<smem>>
    %10 = arith.mulf %0, %4 : f32
    %11 = arith.mulf %2, %5 : f32
    %12 = arith.addf %10, %11 : f32
    %13 = arith.addf %12, %6 : f32
    %14 = arith.mulf %1, %4 : f32
    %15 = arith.mulf %3, %5 : f32
    %16 = arith.addf %14, %15 : f32
    %17 = arith.addf %16, %6 : f32
    %cst = arith.constant 0.000000e+00 : f32
    %18 = arith.maximumf %13, %cst : f32
    %cst_4 = arith.constant 1.000000e+00 : f32
    %19 = arith.minimumf %18, %cst_4 : f32
    %cst_5 = arith.constant 0.000000e+00 : f32
    %20 = arith.maximumf %17, %cst_5 : f32
    %cst_6 = arith.constant 1.000000e+00 : f32
    %21 = arith.minimumf %20, %cst_6 : f32
    %22 = arith.maximumf %0, %1 : f32
    %23 = arith.maximumf %2, %3 : f32
    %24 = arith.addf %22, %19 : f32
    %25 = arith.addf %23, %21 : f32
    %cst_7 = arith.constant -1.000000e+00 : f32
    %26 = arith.cmpf oeq, %24, %cst_7 : f32
    %cst_8 = arith.constant 1.000000e+00 : f32
    %cst_9 = arith.constant 0.000000e+00 : f32
    %27 = arith.select %26, %cst_8, %cst_9 : f32
    %cst_10 = arith.constant -1.000000e+00 : f32
    %28 = arith.cmpf oeq, %25, %cst_10 : f32
    %cst_11 = arith.constant 1.000000e+00 : f32
    %cst_12 = arith.constant 0.000000e+00 : f32
    %29 = arith.select %28, %cst_11, %cst_12 : f32
    %30 = arith.mulf %27, %7 : f32
    %31 = arith.mulf %29, %8 : f32
    %32 = arith.addf %30, %31 : f32
    %33 = arith.addf %32, %9 : f32
    %c0_13 = arith.constant 0 : index
    %c0_14 = arith.constant 0 : index
    %34 = memref.load %arg2[%c0_13, %c0_14] : memref<1x1xf32, #tpu.memory_space<smem>>
    memref.store %33, %arg2[%c0_13, %c0_14] : memref<1x1xf32, #tpu.memory_space<smem>>
    return
  }
}

</mosaic_0001>

<llo_original>
// kernel: model_forward.1
$region0: #{model_forward.1}
  #allocation0 [shape = 'u32[]', space=smem, size = 0x4, offset = 0x4, fixed_abs, tag = 'smem constant byte address 0x4 - core index']
  #allocation1 [shape = 'u32[144,128]{1,0:T(1,128)}', space=vmem, size = 0x12000, scoped, tag = 'internal scratch']
  %s0 = inlined_call_operand.vmem [shape: f32[6], index: 0, kind: input, shape index: {}]
  %s1 = inlined_call_operand.vmem [shape: f32[4], index: 1, kind: input, shape index: {}]
  %s2 = inlined_call_operand.hbm [shape: f32[1,1], index: 2, kind: output, shape index: {}]
  %s3 = sld [smem:[#allocation0]]
  $region26: #{model_forward.1} parent=0
    _
  %s5 = ssub.s32 1, %s3
  %s6 = scalar_select 0, %s5, %s3
  $region1: #{model_forward.1} parent=0
    #allocation2 [shape = 'u8[512]{0}', space=smem, size = 0x200, scoped, tag = 'input window, operand 0, single buffered']
    #allocation3 [shape = 's32[1]{0}', space=sflag, size = 0x4, scoped, tag = 'scoped memory for model_forward.1']
    #allocation4 [shape = 's32[1]{0}', space=sflag, size = 0x4, scoped, tag = 'scoped memory for model_forward.1']
    #allocation5 [shape = 'u8[512]{0}', space=smem, size = 0x200, scoped, tag = 'input window, operand 1, single buffered']
    #allocation6 [shape = 's32[1]{0}', space=sflag, size = 0x4, scoped, tag = 'scoped memory for model_forward.1']
    #allocation7 [shape = 'u8[512]{0}', space=smem, size = 0x200, scoped, tag = 'output window, operand 0, single buffered']
    %7 = vsyncpa [#allocation4], 0
    %8 = vsyncpa [#allocation6], 0
    %9 = vsyncpa [#allocation3], 0
    // Predicated region
    $region2: #{model_forward.1} parent=1 // pred_check
      _
    $region3: #{model_forward.1} parent=1 // pred_check_branch
      %11 = sbr.rel (0) target = $region5
    $region4: #{model_forward.1} parent=1 // pred_region
      %s13 = ssub.s32 16, 16
      %14 = vsyncadd [#allocation4], %s13
      %s16 = sshll.u32 %s0, 4
      %s17 = int_to_ptr.vmem [resolvable:$true] %s16
      %19 = dma.vmem_to_smem %s17, 16, [#allocation2], [#allocation4]
    $region5: #{model_forward.1} parent=1 // pred_fallthru
      _
    // Predicated region
    $region6: #{model_forward.1} parent=1 // pred_check
      _
    $region7: #{model_forward.1} parent=1 // pred_check_branch
      %21 = sbr.rel (0) target = $region9
    $region8: #{model_forward.1} parent=1 // pred_region
      %s23 = ssub.s32 16, 16
      %24 = vsyncadd [#allocation6], %s23
      %s26 = sshll.u32 %s1, 4
      %s27 = int_to_ptr.vmem [resolvable:$true] %s26
      %29 = dma.vmem_to_smem %s27, 16, [#allocation5], [#allocation6]
    $region9: #{model_forward.1} parent=1 // pred_fallthru
      _
    // Predicated region
    $region10: #{model_forward.1} parent=1 // pred_check
      _
    $region11: #{model_forward.1} parent=1 // pred_check_branch
      %31 = sbr.rel (0) target = $region13
    $region12: #{model_forward.1} parent=1 // pred_region
      %32 = dma.done [#allocation4], 16
    $region13: #{model_forward.1} parent=1 // pred_fallthru
      _
    // Predicated region
    $region14: #{model_forward.1} parent=1 // pred_check
      _
    $region15: #{model_forward.1} parent=1 // pred_check_branch
      %34 = sbr.rel (0) target = $region17
    $region16: #{model_forward.1} parent=1 // pred_region
      %35 = dma.done [#allocation6], 16
    $region17: #{model_forward.1} parent=1 // pred_fallthru
      _
    %36 = sfence
    %s37 = sld [smem:[#allocation5]]
    %s38 = sld [smem:[#allocation5 + $0x1]]
    %s39 = sld [smem:[#allocation5 + $0x2]]
    %s40 = sld [smem:[#allocation5 + $0x3]]
    %s41 = sld [smem:[#allocation2]]
    %s42 = sld [smem:[#allocation2 + $0x1]]
    %s43 = sld [smem:[#allocation2 + $0x2]]
    %s44 = sld [smem:[#allocation2 + $0x3]]
    %s45 = sld [smem:[#allocation2 + $0x4]]
    %s46 = sld [smem:[#allocation2 + $0x5]]
    %s47 = smul.f32 %s37, %s41
    %s48 = smul.f32 %s39, %s42
    %s49 = sadd.f32 %s47, %s48
    %s50 = sadd.f32 %s49, %s43
    %s51 = smul.f32 %s38, %s41
    %s52 = smul.f32 %s40, %s42
    %s53 = sadd.f32 %s51, %s52
    %s54 = sadd.f32 %s53, %s43
    %s55 = smax.f32 %s50, 0.0
    %s56 = smin.f32 %s55, 1.0
    %s57 = smax.f32 %s54, 0.0
    %s58 = smin.f32 %s57, 1.0
    %s59 = smax.f32 %s37, %s38
    %s60 = smax.f32 %s39, %s40
    %s61 = sadd.f32 %s59, %s56
    %s62 = sadd.f32 %s60, %s58
    %p63 = scmp.eq.f32.partialorder %s61, -1.0
    %s64 = scalar_select %p63, 1.0, 0.0
    %p65 = scmp.eq.f32.partialorder %s62, -1.0
    %s66 = scalar_select %p65, 1.0, 0.0
    %s67 = smul.f32 %s64, %s44
    %s68 = smul.f32 %s66, %s45
    %s69 = sadd.f32 %s67, %s68
    %s70 = sadd.f32 %s69, %s46
    %s71 = scalar_lea.smem [#allocation7], 0
    %72 = sst [smem:[%s71]] %s70
    // Predicated region
    $region18: #{model_forward.1} parent=1 // pred_check
      _
    $region19: #{model_forward.1} parent=1 // pred_check_branch
      %74 = sbr.rel (0) target = $region21
    $region20: #{model_forward.1} parent=1 // pred_region
      %s76 = ssub.s32 16, 16
      %77 = vsyncadd [#allocation3], %s76
      %80 = dma.smem_to_hbm [#allocation7], 16, %s2, [#allocation3]
    $region21: #{model_forward.1} parent=1 // pred_fallthru
      _
    // Predicated region
    $region22: #{model_forward.1} parent=1 // pred_check
      _
    $region23: #{model_forward.1} parent=1 // pred_check_branch
      %82 = sbr.rel (0) target = $region25
    $region24: #{model_forward.1} parent=1 // pred_region
      %83 = dma.done [#allocation3], 16
    $region25: #{model_forward.1} parent=1 // pred_fallthru
      _
    %84 = sfence
    %85 = vsyncpa [#allocation3], 1
    %86 = vsyncpa [#allocation4], 1
    %87 = vsyncpa [#allocation6], 1

</llo_original>
